<compile_context>
chip_gen: v6e
topology: v6e:2x2x1
jax: 0.10.0
libtpu: 0.0.40
codegen_flags: <defaults>
</compile_context>

<pallas_src>
import math

import jax
import jax.numpy as jnp
from jax import lax
from jax.experimental import pallas as pl
from jax.experimental.pallas import tpu as pltpu


def _round_up(x: int, m: int) -> int:
    return ((x + m - 1) // m) * m


def _target_shape(orig, sizes, transform):
    tgt = list(orig)
    for d in range(min(len(orig), len(sizes))):
        new_size = sizes[d]
        if d in transform:
            new_size = transform[d]
            if new_size == -1:
                continue  # keep original extent
        tgt[d] = int(new_size)
    return tuple(tgt)


def _make_kernel(n_lead, lead_copy, copy_rows, copy_cols, tile_r, tile_c, value):
    row_ax, col_ax = n_lead, n_lead + 1

    def kernel(x_ref, o_ref):
        r0 = pl.program_id(row_ax) * tile_r
        c0 = pl.program_id(col_ax) * tile_c
        rows = r0 + lax.broadcasted_iota(jnp.int32, (tile_r, tile_c), 0)
        cols = c0 + lax.broadcasted_iota(jnp.int32, (tile_r, tile_c), 1)
        mask = (rows < copy_rows) & (cols < copy_cols)
        for d in range(n_lead):
            mask = jnp.logical_and(mask, pl.program_id(d) < lead_copy[d])
        fill = jnp.asarray(value, dtype=o_ref.dtype)
        o_ref[...] = jnp.where(mask, x_ref[...], fill)

    return kernel


def revert_size(features, sizes, value=0, transform=None):
    """JAX/Pallas equivalent of RevertSize.forward for one `sizes` entry."""
    transform = transform or {}
    orig = tuple(int(s) for s in features.shape)
    n = len(orig)
    tgt = _target_shape(orig, sizes, transform)

    if tgt == orig:
        return features                      # nothing to crop or pad
    if math.prod(tgt) == 0:
        return jnp.zeros(tgt, features.dtype)
    if features.size == 0:
        return jnp.full(tgt, value, dtype=features.dtype)

    # ---- canonicalize to (lead..., rows, cols) -----------------------------
    resized = [d for d in range(n) if tgt[d] != orig[d]]
    k = resized[-1]                          # start of the "cols" group
    in_cols = math.prod(orig[k:])
    out_cols = math.prod(tgt[k:])
    copy_cols = min(orig[k], tgt[k]) * math.prod(orig[k + 1:])

    inner = [d for d in resized if d < k]
    if k == 0:
        j = 0
        in_rows = out_rows = copy_rows = 1
    else:
        j = inner[-1] if inner else 0        # start of the "rows" group
        in_rows = math.prod(orig[j:k])
        out_rows = math.prod(tgt[j:k])
        copy_rows = min(orig[j], tgt[j]) * math.prod(orig[j + 1:k])

    lead_copy = [min(orig[d], tgt[d]) for d in range(j)]

    x_canon = features.reshape(orig[:j] + (in_rows, in_cols))
    out_canon_shape = tgt[:j] + (out_rows, out_cols)

    # ---- tile sizes: lane-dense, (8,128)-aligned, VMEM-friendly ------------
    if in_rows == out_rows and out_rows <= 256:
        tile_r = out_rows                    # equal full dim of both arrays
    else:
        tile_r = min(256, _round_up(out_rows, 32))
    tile_c = min(1024, _round_up(out_cols, 128))

    grid = tuple(tgt[:j]) + (pl.cdiv(out_rows, tile_r), pl.cdiv(out_cols, tile_c))
    block = (1,) * j + (tile_r, tile_c)

    in_row_blocks = pl.cdiv(in_rows, tile_r)
    in_col_blocks = pl.cdiv(in_cols, tile_c)
    lead_max = [orig[d] - 1 for d in range(j)]

    def in_index_map(*ids):
        lead = tuple(jnp.minimum(i, m) for i, m in zip(ids[:j], lead_max))
        ri, ci = ids[j], ids[j + 1]
        return lead + (jnp.minimum(ri, in_row_blocks - 1),
                       jnp.minimum(ci, in_col_blocks - 1))

    def out_index_map(*ids):
        return ids

    kernel = _make_kernel(j, lead_copy, copy_rows, copy_cols, tile_r, tile_c, value)

    out = pl.pallas_call(
        kernel,
        out_shape=jax.ShapeDtypeStruct(out_canon_shape, features.dtype),
        grid=grid,
        in_specs=[pl.BlockSpec(block, in_index_map)],
        out_specs=pl.BlockSpec(block, out_index_map),
        compiler_params=pltpu.CompilerParams(
            dimension_semantics=("parallel",) * len(grid)),
    )(x_canon)

    return out.reshape(tgt)


def revert_size_ref(x, sizes, value=0, transform=None):
    """Plain-JAX reference (crop then constant-pad)."""
    transform = transform or {}
    orig = x.shape
    tgt = _target_shape(orig, sizes, transform)
    sl = tuple(slice(0, min(orig[d], tgt[d])) for d in range(len(orig)))
    y = x[sl]
    pads = [(0, max(0, tgt[d] - orig[d])) for d in range(len(orig))]
    return jnp.pad(y, pads, constant_values=jnp.asarray(value, x.dtype))


if __name__ == "__main__":
    key = jax.random.PRNGKey(0)
    x = jax.random.normal(key, (2, 4, 16, 16), dtype=jnp.float32)

    # Config 1: RevertSize(sizes_list=[(2, 4, 24, 16)], value=0.5,
    #                      transform={1: -1, 3: 12})
    #   -> pad H 16->24 with 0.5, crop W 16->12, dim 1 kept via transform=-1.
    sizes_list = [(2, 4, 24, 16)]
    value = 0.5
    transform = {1: -1, 3: 12}

    sizes = sizes_list.pop()                 # mimic the module's forward()
    y = revert_size(x, sizes, value=value, transform=transform)
    jax.block_until_ready(y)

    ref = revert_size_ref(x, sizes, value=value, transform=transform)
    assert y.shape == ref.shape == (2, 4, 24, 12), y.shape
    assert bool(jnp.array_equal(y, ref)), "mismatch vs reference (config 1)"

    # Config 2: pad the channel dim (4->6) and crop H (16->8), W unchanged.
    sizes2 = (2, 6, 8, 16)
    y2 = revert_size(x, sizes2, value=0)
    jax.block_until_ready(y2)
    ref2 = revert_size_ref(x, sizes2, value=0)
    assert y2.shape == ref2.shape == (2, 6, 8, 16), y2.shape
    assert bool(jnp.array_equal(y2, ref2)), "mismatch vs reference (config 2)"

    print("KERNEL_OK")
</pallas_src>

<mosaic_0001>
module attributes {stable_mosaic.version = 11 : i64} {
  func.func @kernel(%arg0: i32, %arg1: i32, %arg2: i32, %arg3: i32, %arg4: memref<1x1x32x128xf32, #tpu.memory_space<vmem>>, %arg5: memref<1x1x32x128xf32, #tpu.memory_space<vmem>>) attributes {dimension_semantics = [#tpu.dimension_semantics<parallel>, #tpu.dimension_semantics<parallel>, #tpu.dimension_semantics<parallel>, #tpu.dimension_semantics<parallel>], iteration_bounds = array<i64: 2, 4, 1, 1>, scalar_prefetch = 0 : i64, scratch_operands = 0 : i64, tpu.core_type = #tpu.core_type<tc>, window_params = [{transform_indices = @transform_0, window_bounds = array<i64: 1, 1, 32, 128>}, {transform_indices = @transform_1, window_bounds = array<i64: 1, 1, 32, 128>}]} {
    %c32_i32 = arith.constant 32 : i32
    %0 = arith.muli %arg2, %c32_i32 : i32
    %c128_i32 = arith.constant 128 : i32
    %1 = arith.muli %arg3, %c128_i32 : i32
    %2 = tpu.iota {dimensions = array<i32: 0>} : vector<32x128xi32>
    %3 = vector.broadcast %0 : i32 to vector<32x128xi32>
    %4 = arith.addi %3, %2 : vector<32x128xi32>
    %5 = tpu.iota {dimensions = array<i32: 1>} : vector<32x128xi32>
    %6 = vector.broadcast %1 : i32 to vector<32x128xi32>
    %7 = arith.addi %6, %5 : vector<32x128xi32>
    %c16_i32 = arith.constant 16 : i32
    %8 = vector.broadcast %c16_i32 : i32 to vector<32x128xi32>
    %9 = arith.cmpi slt, %4, %8 : vector<32x128xi32>
    %c12_i32 = arith.constant 12 : i32
    %10 = vector.broadcast %c12_i32 : i32 to vector<32x128xi32>
    %11 = arith.cmpi slt, %7, %10 : vector<32x128xi32>
    %12 = arith.andi %9, %11 : vector<32x128xi1>
    %c2_i32 = arith.constant 2 : i32
    %13 = arith.cmpi slt, %arg0, %c2_i32 : i32
    %14 = vector.broadcast %13 : i1 to vector<32x128xi1>
    %15 = arith.andi %12, %14 : vector<32x128xi1>
    %c4_i32 = arith.constant 4 : i32
    %16 = arith.cmpi slt, %arg1, %c4_i32 : i32
    %17 = vector.broadcast %16 : i1 to vector<32x128xi1>
    %18 = arith.andi %15, %17 : vector<32x128xi1>
    %c0 = arith.constant 0 : index
    %c0_0 = arith.constant 0 : index
    %c0_1 = arith.constant 0 : index
    %c0_2 = arith.constant 0 : index
    %19 = vector.load %arg4[%c0, %c0_0, %c0_1, %c0_2] : memref<1x1x32x128xf32, #tpu.memory_space<vmem>>, vector<1x1x32x128xf32>
    %cst = arith.constant 5.000000e-01 : f32
    %20 = vector.shape_cast %18 : vector<32x128xi1> to vector<1x1x32x128xi1>
    %21 = vector.broadcast %cst : f32 to vector<1x1x32x128xf32>
    %22 = arith.select %20, %19, %21 : vector<1x1x32x128xi1>, vector<1x1x32x128xf32>
    %c0_3 = arith.constant 0 : index
    %c0_4 = arith.constant 0 : index
    %c0_5 = arith.constant 0 : index
    %c0_6 = arith.constant 0 : index
    %23 = vector.load %arg5[%c0_3, %c0_4, %c0_5, %c0_6] : memref<1x1x32x128xf32, #tpu.memory_space<vmem>>, vector<1x1x32x128xf32>
    tpu.vector_store %arg5[%c0_3, %c0_4, %c0_5, %c0_6], %22 {strides = array<i32>} : memref<1x1x32x128xf32, #tpu.memory_space<vmem>>, vector<1x1x32x128xf32>,
    return
  }
  func.func @transform_0(%arg0: i32, %arg1: i32, %arg2: i32, %arg3: i32) -> (i32, i32, i32, i32) {
    %c1_i32 = arith.constant 1 : i32
    %0 = arith.minsi %arg0, %c1_i32 : i32
    %c3_i32 = arith.constant 3 : i32
    %1 = arith.minsi %arg1, %c3_i32 : i32
    %c0_i32 = arith.constant 0 : i32
    %2 = arith.minsi %arg2, %c0_i32 : i32
    %c0_i32_0 = arith.constant 0 : i32
    %3 = arith.minsi %arg3, %c0_i32_0 : i32
    %c0_i32_1 = arith.constant 0 : i32
    return %0, %1, %2, %3 : i32, i32, i32, i32
  }
  func.func @transform_1(%arg0: i32, %arg1: i32, %arg2: i32, %arg3: i32) -> (i32, i32, i32, i32) {
    %c0_i32 = arith.constant 0 : i32
    return %arg0, %arg1, %arg2, %arg3 : i32, i32, i32, i32
  }
}

</mosaic_0001>

<llo_original>
// kernel: tpu_custom_call.1
$region0: #{tpu_custom_call.1}
  #allocation0 [shape = 'u32[]', space=smem, size = 0x4, offset = 0x4, fixed_abs, tag = 'smem constant byte address 0x4 - core index']
  #allocation1 [shape = 'u32[144,128]{1,0:T(1,128)}', space=vmem, size = 0x12000, scoped, tag = 'internal scratch']
  %s0 = inlined_call_operand.hbm [shape: f32[2,4,16,16], index: 0, kind: input, shape index: {}]
  %s1 = inlined_call_operand.vmem [shape: f32[2,4,24,12], index: 1, kind: output, shape index: {}]
  %s2 = sld [smem:[#allocation0]]
  $region89: #{tpu_custom_call.1} parent=0
    _
  %s4 = ssub.s32 1, %s2
  %s5 = scalar_select 0, %s4, %s2
  $region1: #{tpu_custom_call.1} parent=0
    #allocation2 [shape = 'u8[32768]{0}', space=vmem, size = 0x8000, scoped, tag = 'input window, operand 0']
    #allocation3 [shape = 's32[2]{0}', space=sflag, size = 0x8, scoped, tag = 'scoped memory for tpu_custom_call.1']
    #allocation4 [shape = 'u8[32768]{0}', space=vmem, size = 0x8000, scoped, tag = 'output window, operand 0']
    %6 = vsyncpa [#allocation3], 0
    %s7 = scalar_lea.sflag [#allocation3], 1
    %8 = vsyncpa %s7, 0
    loop: start=0, step=1, limit=10
    $region2: #{tpu_custom_call.1} parent=1 // loop_pre_header
      _
    $region3: #{tpu_custom_call.1} parent=1 // loop_header
      %s10 = sphi 0, %s14
      %p11 = scmp.ge.s32.totalorder %s10, 10
      %s17 = sphi 0, %s43
      %s18 = sphi 0, %s39
      %s19 = sphi 0, %s35
      %s20 = sphi 0, %s31
      %s21 = sphi 0, %s17
      %s22 = sphi 0, %s18
      %s23 = sphi 0, %s19
      %s24 = sphi 0, %s20
      %s25 = sphi 0, %s21
      %s26 = sphi 0, %s22
      %s27 = sphi 0, %s23
      %s28 = sphi 0, %s24
      %s68 = sphi 0, %s70
      %s71 = sphi 0, %s68
      %s72 = sphi 0, %s71
      %s88 = sphi 0, %s72
      %s100 = sphi 0, %s102
      %s103 = sphi 0, %s100
      %s104 = sphi 0, %s103
      %s120 = sphi 0, %s104
    $region4: #{tpu_custom_call.1} parent=1 // loop_header_branch
      %13 = sbr.rel (%p11) target = $region8
    $region5: #{tpu_custom_call.1} parent=1 // loop_body
      %s15 = ssub.s32 %s10, 1
      %s16 = ssub.s32 %s10, 2
      %s29 = sadd.s32 1, %s20
      %p30 = scmp.ge.s32.totalorder %s29, 1
      %s31 = scalar_select %p30, 0, %s29
      %s32 = sadd.s32 1, %s19
      %s33 = scalar_select %p30, %s32, %s19
      %p34 = scmp.ge.s32.totalorder %s33, 1
      %s35 = scalar_select %p34, 0, %s33
      %s36 = sadd.s32 1, %s18
      %s37 = scalar_select %p34, %s36, %s18
      %p38 = scmp.ge.s32.totalorder %s37, 4
      %s39 = scalar_select %p38, 0, %s37
      %s40 = sadd.s32 1, %s17
      %s41 = scalar_select %p38, %s40, %s17
      %p42 = scmp.ge.s32.totalorder %s41, 2
      %s43 = scalar_select %p42, 0, %s41
      %p44 = scmp.lt.s32.totalorder %s17, 1
      %s45 = scalar_select %p44, %s17, 1
      %p46 = scmp.lt.s32.totalorder %s18, 3
      %s47 = scalar_select %p46, %s18, 3
      %p48 = scmp.lt.s32.totalorder %s19, 0
      %s49 = scalar_select %p48, %s19, 0
      %p50 = scmp.lt.s32.totalorder %s20, 0
      %s51 = scalar_select %p50, %s20, 0
      %p52 = scmp.lt.s32.totalorder %s43, 1
      %s53 = scalar_select %p52, %s43, 1
      %p54 = scmp.lt.s32.totalorder %s39, 3
      %s55 = scalar_select %p54, %s39, 3
      %p56 = scmp.lt.s32.totalorder %s35, 0
      %s57 = scalar_select %p56, %s35, 0
      %p58 = scmp.lt.s32.totalorder %s31, 0
      %s59 = scalar_select %p58, %s31, 0
      %s60 = ssub.s32 %s45, %s53
      %s61 = ssub.s32 %s47, %s55
      %s62 = sor.u32 %s60, %s61
      %s63 = ssub.s32 %s49, %s57
      %s64 = sor.u32 %s62, %s63
      %s65 = ssub.s32 %s51, %s59
      %s66 = sor.u32 %s64, %s65
      %p67 = scmp.eq.s32.totalorder %s66, 0
      %s69 = sadd.s32 %s68, 1
      %s70 = scalar_select %p67, %s68, %s69
      %p73 = pneg %p67
      %p74 = scmp.eq.s32.totalorder %s10, 7
      %p75 = por %p73, %p74
      %p76 = scmp.ne.s32.totalorder %s68, %s71
      %p77 = scmp.eq.s32.totalorder %s10, 0
      %p78 = por %p76, %p77
      %p79 = scmp.ne.s32.totalorder %s68, %s71
      %p80 = scmp.eq.s32.totalorder %s15, 7
      %p81 = por %p79, %p80
      %p82 = scmp.ne.s32.totalorder %s71, %s72
      %p83 = scmp.eq.s32.totalorder %s15, 0
      %p84 = por %p82, %p83
      %p85 = scmp.ne.s32.totalorder %s71, %s72
      %p86 = scmp.eq.s32.totalorder %s16, 7
      %p87 = por %p85, %p86
      %p89 = scmp.ne.s32.totalorder %s72, %s88
      %p90 = scmp.eq.s32.totalorder %s16, 0
      %p91 = por %p89, %p90
      %s92 = ssub.s32 %s17, %s43
      %s93 = ssub.s32 %s18, %s39
      %s94 = sor.u32 %s92, %s93
      %s95 = ssub.s32 %s19, %s35
      %s96 = sor.u32 %s94, %s95
      %s97 = ssub.s32 %s20, %s31
      %s98 = sor.u32 %s96, %s97
      %p99 = scmp.eq.s32.totalorder %s98, 0
      %s101 = sadd.s32 %s100, 1
      %s102 = scalar_select %p99, %s100, %s101
      %p105 = pneg %p99
      %p106 = scmp.eq.s32.totalorder %s10, 7
      %p107 = por %p105, %p106
      %p108 = scmp.ne.s32.totalorder %s100, %s103
      %p109 = scmp.eq.s32.totalorder %s10, 0
      %p110 = por %p108, %p109
      %p111 = scmp.ne.s32.totalorder %s100, %s103
      %p112 = scmp.eq.s32.totalorder %s15, 7
      %p113 = por %p111, %p112
      %p114 = scmp.ne.s32.totalorder %s103, %s104
      %p115 = scmp.eq.s32.totalorder %s15, 0
      %p116 = por %p114, %p115
      %p117 = scmp.ne.s32.totalorder %s103, %s104
      %p118 = scmp.eq.s32.totalorder %s16, 7
      %p119 = por %p117, %p118
      %p121 = scmp.ne.s32.totalorder %s104, %s120
      %p122 = scmp.eq.s32.totalorder %s16, 0
      %p123 = por %p121, %p122
      %p124 = scmp.le.s32.totalorder 1, %s10
      %p125 = scmp.lt.s32.totalorder %s10, 9
      %p126 = pnand %p124, %p125
      %p127 = pneg %p126
      // Predicated region
      $region9: #{tpu_custom_call.1} parent=5 // pred_check
        _
      $region10: #{tpu_custom_call.1} parent=5 // pred_check_branch
        %129 = sbr.rel (%p126) target = $region12
      $region11: #{tpu_custom_call.1} parent=5 // pred_region
        %s130 = ssub.s32 %s10, 1
      $region12: #{tpu_custom_call.1} parent=5 // pred_fallthru
        _
      %p131 = scmp.lt.s32.totalorder %s10, 8
      // Predicated region
      $region13: #{tpu_custom_call.1} parent=5 // pred_check
        %p132 = pneg %p131
      $region14: #{tpu_custom_call.1} parent=5 // pred_check_branch
        %134 = sbr.rel (%p132) target = $region16
      $region15: #{tpu_custom_call.1} parent=5 // pred_region
        // Predicated region
        $region17: #{tpu_custom_call.1} parent=15 // pred_check
          %p135 = pneg %p78
        $region18: #{tpu_custom_call.1} parent=15 // pred_check_branch
          %137 = sbr.rel (%p135) target = $region20
        $region19: #{tpu_custom_call.1} parent=15 // pred_region
          %s138 = sand.u32 %s68, 1
          %s139 = scalar_lea.sflag [#allocation3], %s138
          %s140 = sand.u32 %s68, 1
          %s141 = smul.addr %s140, 32
          %s142 = scalar_lea.vmem [#allocation2], %s141
          %p143 = scmp.lt.s32.totalorder %s17, 1
          %s144 = scalar_select %p143, %s17, 1
          %p145 = scmp.lt.s32.totalorder %s18, 3
          %s146 = scalar_select %p145, %s18, 3
          %p147 = scmp.lt.s32.totalorder %s19, 0
          %s148 = scalar_select %p147, %s19, 0
          %p149 = scmp.lt.s32.totalorder %s20, 0
          %s150 = scalar_select %p149, %s20, 0
          %s151 = smul.u32 4, %s148
          %s152 = ssub.s32 2, %s151
          %s153 = smul.u32 128, %s152
          %s155 = ssub.s32 512, %s153
          %156 = vsyncadd %s139, %s155
          %p157 = scmp.ne.s32.totalorder 0, %s153
          %s158 = sadd.s32 %s150, %s151
          %s159 = smul.addr %s146, 2
          %s160 = sadd.s32 %s158, %s159
          %s161 = smul.addr %s144, 8
          %s162 = sadd.s32 %s160, %s161
          %s163 = smul.addr %s162, 128
          %s164 = scalar_lea.hbm %s0, %s163
          %s165 = smul.u32 8, %s152
          %s166 = sshll.u32 %s142, 4
          %s167 = int_to_ptr.vmem [resolvable:$true] %s166
          %s168 = sshll.u32 %s165, 4
          %172 = dma.hbm_to_vmem [thread:$0]  (%p157), %s164, %s168, %s167, %s139, 128, 128, 8
        $region20: #{tpu_custom_call.1} parent=15 // pred_fallthru
          _
      $region16: #{tpu_custom_call.1} parent=5 // pred_fallthru
        _
      %p173 = scmp.le.s32.totalorder 1, %s10
      %p174 = scmp.lt.s32.totalorder %s10, 9
      %p175 = pnand %p173, %p174
      %p176 = pneg %p175
      // Predicated region
      $region21: #{tpu_custom_call.1} parent=5 // pred_check
        _
      $region22: #{tpu_custom_call.1} parent=5 // pred_check_branch
        %178 = sbr.rel (%p175) target = $region24
      $region23: #{tpu_custom_call.1} parent=5 // pred_region
        %s179 = ssub.s32 %s10, 1
        %s180 = sand.u32 %s71, 1
        %s181 = scalar_lea.sflag [#allocation3], %s180
        %s182 = sand.u32 %s71, 1
        %s183 = smul.addr %s182, 32
        %s184 = scalar_lea.vmem [#allocation2], %s183
        // Predicated region
        $region25: #{tpu_custom_call.1} parent=23 // pred_check
          %p185 = pneg %p84
        $region26: #{tpu_custom_call.1} parent=23 // pred_check_branch
          %187 = sbr.rel (%p185) target = $region28
        $region27: #{tpu_custom_call.1} parent=23 // pred_region
          %188 = dma.done %s181, 512
        $region28: #{tpu_custom_call.1} parent=23 // pred_fallthru
          _
        %s189 = sand.u32 %s71, 1
        %s190 = scalar_lea.sflag [#allocation3], %s189
        %s191 = sand.u32 %s71, 1
        %s192 = smul.addr %s191, 32
        %s193 = scalar_lea.vmem [#allocation2], %s192
        %p194 = pneg %p84
        %p195 = pneg %p81
        %p196 = pneg %p116
        %p197 = pneg %p113
        %s198 = sand.u32 %s103, 1
        %s199 = sand.u32 %s103, 1
        %s200 = smul.addr %s199, 32
        %s201 = scalar_lea.vmem [#allocation4], %s200
        %p202 = scmp.lt.s32.totalorder %s21, 1
        %s203 = scalar_select %p202, %s21, 1
        %p204 = scmp.lt.s32.totalorder %s22, 3
        %s205 = scalar_select %p204, %s22, 3
        %p206 = scmp.lt.s32.totalorder %s23, 0
        %s207 = scalar_select %p206, %s23, 0
        %p208 = scmp.lt.s32.totalorder %s24, 0
        %s209 = scalar_select %p208, %s24, 0
        %s210 = smul.u32 4, %s207
        %s211 = ssub.s32 2, %s210
        %s212 = smul.u32 128, %s211
        %s213 = smul.u32 4, %s23
        %s214 = ssub.s32 3, %s213
        %s215 = smul.u32 128, %s214
        %s216 = smul.u32 %s23, 32
        %s217 = smul.u32 %s24, 128
        %v218 = vlaneseq
        %v219 = vshrl.u32 %v218, 7
        %v220 = vadd.s32 %v219, 8
        %v221 = vadd.s32 %v219, 16
        %v222 = vadd.s32 %v219, 24
        %v223 = vstv %s216
        %v224 = vadd.s32 %v223, %v219
        %v225 = vadd.s32 %v223, %v220
        %v226 = vadd.s32 %v223, %v221
        %v227 = vadd.s32 %v223, %v222
        %v228 = vlaneseq
        %v229 = vand.u32 %v228, 127
        %v230 = vstv %s217
        %v231 = vadd.s32 %v230, %v229
        %vm232 = vcmp.lt.s32.totalorder %v224, 16
        %vm233 = vcmp.lt.s32.totalorder %v225, 16
        %vm234 = vcmp.lt.s32.totalorder %v226, 16
        %vm235 = vcmp.lt.s32.totalorder %v227, 16
        %vm236 = vcmp.lt.s32.totalorder %v231, 12
        %vm237 = vmand %vm232, %vm236
        %vm238 = vmand %vm233, %vm236
        %vm239 = vmand %vm234, %vm236
        %vm240 = vmand %vm235, %vm236
        %p241 = scmp.lt.s32.totalorder %s21, 2
        %s242 = scalar_select %p241, 1, 0
        %v243 = vstv %s242
        %vm244 = vcmp.eq.s32.totalorder %v243, 1
        %vm245 = vmand %vm237, %vm244
        %vm246 = vmand %vm238, %vm244
        %vm247 = vmand %vm239, %vm244
        %vm248 = vmand %vm240, %vm244
        %p249 = scmp.lt.s32.totalorder %s22, 4
        %s250 = scalar_select %p249, 1, 0
        %v251 = vstv %s250
        %vm252 = vcmp.eq.s32.totalorder %v251, 1
        %vm253 = vmand %vm245, %vm252
        %vm254 = vmand %vm246, %vm252
        %vm255 = vmand %vm247, %vm252
        %vm256 = vmand %vm248, %vm252
        %v257 = vld [vmem:[%s184] sm:$0xff]
        %v258 = vld [vmem:[%s184 + $0x8] sm:$0xff]
        %v259 = vld [vmem:[%s184 + $0x10] sm:$0xff]
        %v260 = vld [vmem:[%s184 + $0x18] sm:$0xff]
        %v261 = vsel %vm253, %v257, 0.5
        %v262 = vsel %vm254, %v258, 0.5
        %v263 = vsel %vm255, %v259, 0.5
        %v264 = vsel %vm256, %v260, 0.5
        %265 = vst [vmem:[%s201] sm:$0xff] %v261
        %266 = vst [vmem:[%s201 + $0x8] sm:$0xff] %v262
        %267 = vst [vmem:[%s201 + $0x10] sm:$0xff] %v263
        %268 = vst [vmem:[%s201 + $0x18] sm:$0xff] %v264
        %s269 = sand.u32 %s103, 1
        %s270 = sand.u32 %s103, 1
        %s271 = smul.addr %s270, 32
        %s272 = scalar_lea.vmem [#allocation4], %s271
        // Predicated region
        $region29: #{tpu_custom_call.1} parent=23 // pred_check
          %p273 = pneg %p113
        $region30: #{tpu_custom_call.1} parent=23 // pred_check_branch
          %275 = sbr.rel (%p273) target = $region32
        $region31: #{tpu_custom_call.1} parent=23 // pred_region
          %s276 = smul.u32 4, %s23
          %s277 = ssub.s32 3, %s276
          %s278 = smul.u32 128, %s277
          %p279 = scmp.ne.s32.totalorder 0, %s278
          %s280 = sadd.s32 %s24, %s276
          %s281 = smul.addr %s22, 3
          %s282 = sadd.s32 %s280, %s281
          %s283 = smul.addr %s21, 12
          %s284 = sadd.s32 %s282, %s283
          %s285 = smul.addr %s284, 8
          %s286 = scalar_lea.vmem %s1, %s285
          // Predicated region
          $region33: #{tpu_custom_call.1} parent=31 // pred_check
            %p287 = pneg %p279
          $region34: #{tpu_custom_call.1} parent=31 // pred_check_branch
            %289 = sbr.rel (%p287) target = $region36
          $region35: #{tpu_custom_call.1} parent=31 // pred_region
            // Predicated region
            $region37: #{tpu_custom_call.1} parent=35 // pred_check
              _
            $region38: #{tpu_custom_call.1} parent=35 // pred_check_branch
              %291 = sbr.rel (0) target = $region40
            $region39: #{tpu_custom_call.1} parent=35 // pred_region
              // Predicated region
              $region59: #{tpu_custom_call.1} parent=39 // pred_check
                _
              $region60: #{tpu_custom_call.1} parent=39 // pred_check_branch
                %346 = sbr.rel (0) target = $region62
              $region61: #{tpu_custom_call.1} parent=39 // pred_region
                %s347 = sdiv.u32.pop %s277, 3
                %s348 = srem.u32.pop %s277, 3
                // While loop
                $region63: #{tpu_custom_call.1} parent=61 // loop_pre_header
                  _
                $region64: #{tpu_custom_call.1} parent=61 // loop_header
                  %s350 = sphi 0, %s352
                  %p351 = scmp.ge.s32.totalorder %s350, %s347
                  %s355 = sphi 0, %s366
                  %s356 = sphi %s272, %s369
                  %s357 = sphi %s286, %s370
                $region65: #{tpu_custom_call.1} parent=61 // loop_header_branch
                  %354 = sbr.rel (%p351) target = $region69
                $region66: #{tpu_custom_call.1} parent=61 // loop_body
                  %v358 = vld [vmem:[%s356] sm:$0xff]
                  %359 = vst [vmem:[%s357] sm:$0xff] %v358
                  %v360 = vld [vmem:[%s356 + $0x8] sm:$0xff]
                  %361 = vst [vmem:[%s357 + $0x8] sm:$0xff] %v360
                  %v362 = vld [vmem:[%s356 + $0x10] sm:$0xff]
                  %363 = vst [vmem:[%s357 + $0x10] sm:$0xff] %v362
                  %s364 = sadd.s32 1, %s355
                  %p365 = scmp.ge.s32.totalorder %s364, %s347
                  %s366 = scalar_select %p365, 0, %s364
                  %s367 = smul.u32 %s366, 24
                  %s368 = smul.u32 %s366, 24
                  %s369 = scalar_lea.vmem %s272, %s367 [#allocation4]
                  %s370 = scalar_lea.vmem %s286, %s368
                $region67: #{tpu_custom_call.1} parent=61 // loop_footer
                  %s352 = sadd.s32 %s350, 1
                $region68: #{tpu_custom_call.1} parent=61 // loop_footer_branch
                  %349 = sbr.rel target = $region64
                $region69: #{tpu_custom_call.1} parent=61 // loop_exit
                  _
                %s371 = sdiv.u32.pop %s277, 3
                %s372 = srem.u32.pop %s277, 3
                %s373 = smul.u32 %s371, 3
                %s374 = smul.u32 8, %s373
                %s375 = scalar_lea.vmem %s272, %s374 [#allocation4]
                %s376 = smul.u32 8, %s373
                %s377 = scalar_lea.vmem %s286, %s376
                // While loop
                $region70: #{tpu_custom_call.1} parent=61 // loop_pre_header
                  _
                $region71: #{tpu_custom_call.1} parent=61 // loop_header
                  %s379 = sphi 0, %s381
                  %p380 = scmp.ge.s32.totalorder %s379, %s372
                  %s384 = sphi 0, %s391
                  %s385 = sphi %s375, %s394
                  %s386 = sphi %s377, %s395
                $region72: #{tpu_custom_call.1} parent=61 // loop_header_branch
                  %383 = sbr.rel (%p380) target = $region76
                $region73: #{tpu_custom_call.1} parent=61 // loop_body
                  %v387 = vld [vmem:[%s385] sm:$0xff]
                  %388 = vst [vmem:[%s386] sm:$0xff] %v387
                  %s389 = sadd.s32 1, %s384
                  %p390 = scmp.ge.s32.totalorder %s389, %s372
                  %s391 = scalar_select %p390, 0, %s389
                  %s392 = smul.u32 %s391, 8
                  %s393 = smul.u32 %s391, 8
                  %s394 = scalar_lea.vmem %s375, %s392 [#allocation4]
                  %s395 = scalar_lea.vmem %s377, %s393
                $region74: #{tpu_custom_call.1} parent=61 // loop_footer
                  %s381 = sadd.s32 %s379, 1
                $region75: #{tpu_custom_call.1} parent=61 // loop_footer_branch
                  %378 = sbr.rel target = $region71
                $region76: #{tpu_custom_call.1} parent=61 // loop_exit
                  _
              $region62: #{tpu_custom_call.1} parent=39 // pred_fallthru
                _
              // Predicated region
              $region77: #{tpu_custom_call.1} parent=39 // pred_check
                _
              $region78: #{tpu_custom_call.1} parent=39 // pred_check_branch
                %397 = sbr.rel target = $region80
              $region79: #{tpu_custom_call.1} parent=39 // pred_region
                _
              $region80: #{tpu_custom_call.1} parent=39 // pred_fallthru
                _
            $region40: #{tpu_custom_call.1} parent=35 // pred_fallthru
              _
            // Predicated region
            $region41: #{tpu_custom_call.1} parent=35 // pred_check
              _
            $region42: #{tpu_custom_call.1} parent=35 // pred_check_branch
              %293 = sbr.rel target = $region44
            $region43: #{tpu_custom_call.1} parent=35 // pred_region
              %s295 = ssub.s32 256, 1
              %s296 = sdiv.u32.pop %s277, 3
              %s297 = srem.u32.pop %s277, 3
              // While loop
              $region45: #{tpu_custom_call.1} parent=43 // loop_pre_header
                _
              $region46: #{tpu_custom_call.1} parent=43 // loop_header
                %s299 = sphi 0, %s301
                %p300 = scmp.ge.s32.totalorder %s299, %s296
                %s304 = sphi 0, %s315
                %s305 = sphi %s272, %s318
                %s306 = sphi %s286, %s319
              $region47: #{tpu_custom_call.1} parent=43 // loop_header_branch
                %303 = sbr.rel (%p300) target = $region51
              $region48: #{tpu_custom_call.1} parent=43 // loop_body
                %v307 = vld [vmem:[%s305] sm:%s295]
                %308 = vst [vmem:[%s306] sm:%s295] %v307
                %v309 = vld [vmem:[%s305 + $0x8] sm:%s295]
                %310 = vst [vmem:[%s306 + $0x8] sm:%s295] %v309
                %v311 = vld [vmem:[%s305 + $0x10] sm:%s295]
                %312 = vst [vmem:[%s306 + $0x10] sm:%s295] %v311
                %s313 = sadd.s32 1, %s304
                %p314 = scmp.ge.s32.totalorder %s313, %s296
                %s315 = scalar_select %p314, 0, %s313
                %s316 = smul.u32 %s315, 24
                %s317 = smul.u32 %s315, 24
                %s318 = scalar_lea.vmem %s272, %s316 [#allocation4]
                %s319 = scalar_lea.vmem %s286, %s317
              $region49: #{tpu_custom_call.1} parent=43 // loop_footer
                %s301 = sadd.s32 %s299, 1
              $region50: #{tpu_custom_call.1} parent=43 // loop_footer_branch
                %298 = sbr.rel target = $region46
              $region51: #{tpu_custom_call.1} parent=43 // loop_exit
                _
              %s320 = sdiv.u32.pop %s277, 3
              %s321 = srem.u32.pop %s277, 3
              %s322 = smul.u32 %s320, 3
              %s323 = smul.u32 8, %s322
              %s324 = scalar_lea.vmem %s272, %s323 [#allocation4]
              %s325 = smul.u32 8, %s322
              %s326 = scalar_lea.vmem %s286, %s325
              // While loop
              $region52: #{tpu_custom_call.1} parent=43 // loop_pre_header
                _
              $region53: #{tpu_custom_call.1} parent=43 // loop_header
                %s328 = sphi 0, %s330
                %p329 = scmp.ge.s32.totalorder %s328, %s321
                %s333 = sphi 0, %s340
                %s334 = sphi %s324, %s343
                %s335 = sphi %s326, %s344
              $region54: #{tpu_custom_call.1} parent=43 // loop_header_branch
                %332 = sbr.rel (%p329) target = $region58
              $region55: #{tpu_custom_call.1} parent=43 // loop_body
                %v336 = vld [vmem:[%s334] sm:%s295]
                %337 = vst [vmem:[%s335] sm:%s295] %v336
                %s338 = sadd.s32 1, %s333
                %p339 = scmp.ge.s32.totalorder %s338, %s321
                %s340 = scalar_select %p339, 0, %s338
                %s341 = smul.u32 %s340, 8
                %s342 = smul.u32 %s340, 8
                %s343 = scalar_lea.vmem %s324, %s341 [#allocation4]
                %s344 = scalar_lea.vmem %s326, %s342
              $region56: #{tpu_custom_call.1} parent=43 // loop_footer
                %s330 = sadd.s32 %s328, 1
              $region57: #{tpu_custom_call.1} parent=43 // loop_footer_branch
                %327 = sbr.rel target = $region53
              $region58: #{tpu_custom_call.1} parent=43 // loop_exit
                _
            $region44: #{tpu_custom_call.1} parent=35 // pred_fallthru
              _
          $region36: #{tpu_custom_call.1} parent=31 // pred_fallthru
            _
          %398 = vnop
        $region32: #{tpu_custom_call.1} parent=23 // pred_fallthru
          _
      $region24: #{tpu_custom_call.1} parent=5 // pred_fallthru
        _
      %p399 = scmp.le.s32.totalorder 2, %s10
      // Predicated region
      $region81: #{tpu_custom_call.1} parent=5 // pred_check
        %p400 = pneg %p399
      $region82: #{tpu_custom_call.1} parent=5 // pred_check_branch
        %402 = sbr.rel (%p400) target = $region84
      $region83: #{tpu_custom_call.1} parent=5 // pred_region
        %s403 = ssub.s32 %s10, 2
        // Predicated region
        $region85: #{tpu_custom_call.1} parent=83 // pred_check
          %p404 = pneg %p119
        $region86: #{tpu_custom_call.1} parent=83 // pred_check_branch
          %406 = sbr.rel (%p404) target = $region88
        $region87: #{tpu_custom_call.1} parent=83 // pred_region
          %s407 = sand.u32 %s104, 1
          %s408 = sand.u32 %s104, 1
          %s409 = smul.addr %s408, 32
          %s410 = scalar_lea.vmem [#allocation4], %s409
        $region88: #{tpu_custom_call.1} parent=83 // pred_fallthru
          _
      $region84: #{tpu_custom_call.1} parent=5 // pred_fallthru
        _
    $region6: #{tpu_custom_call.1} parent=1 // loop_footer
      %s14 = sadd.s32 1, %s10
    $region7: #{tpu_custom_call.1} parent=1 // loop_footer_branch
      %9 = sbr.rel target = $region3
    $region8: #{tpu_custom_call.1} parent=1 // loop_exit
      _
    %411 = vsyncpa [#allocation3], 1
    %s412 = scalar_lea.sflag [#allocation3], 1
    %413 = vsyncpa %s412, 1

</llo_original>
